<compile_context>
chip_gen: v7x
topology: tpu7x:2x2x1
jax: 0.10.0
libtpu: 0.0.40
codegen_flags: <defaults>
</compile_context>

<pallas_src>
import jax
import jax.numpy as jnp
from jax.experimental import pallas as pl
from jax.experimental.pallas import tpu as pltpu


def _round_up(x, m):
    return ((x + m - 1) // m) * m


def _activation_up_kernel(a_ref, p_ref, q_ref, p_out_ref):
    # p_out = p + a * tanh(q); a is (1, tn) and broadcasts over the row axis.
    # Widen to f32 for the transcendental + multiply, store back in I/O dtype.
    p32 = p_ref[...].astype(jnp.float32)
    q32 = q_ref[...].astype(jnp.float32)
    p_out_ref[...] = (p32 + a_ref[...] * jnp.tanh(q32)).astype(p_out_ref.dtype)


def _activation_up_pallas(p, q, a, *, block_rows=512, block_cols=1024):
    """Returns p + a * tanh(q). p is donated/aliased onto the output."""
    N, n = p.shape
    itemsize = jnp.dtype(p.dtype).itemsize
    # Sublane packing: 8 rows for 32-bit dtypes, 16 for 16-bit (bf16).
    row_align = 16 if itemsize == 2 else 8

    # Row tile: up to block_rows, sublane-aligned.
    tm = min(_round_up(block_rows, row_align), _round_up(N, row_align))
    # Feature tile: up to block_cols, lane-aligned (multiple of 128).
    tn = min(_round_up(block_cols, 128), _round_up(n, 128))

    # Pad so both grid axes divide evenly (lane-dense stores, no ragged last
    # block touching the aliased p buffer).  Pad region computes 0 + a*tanh(0)
    # and is sliced away afterwards.
    Np = _round_up(N, tm)
    Nn = _round_up(n, tn)

    a2d = a.reshape(1, -1).astype(jnp.float32)   # keep a's precision in f32
    if Np != N or Nn != n:
        p = jnp.pad(p, ((0, Np - N), (0, Nn - n)))
        q = jnp.pad(q, ((0, Np - N), (0, Nn - n)))
        a2d = jnp.pad(a2d, ((0, 0), (0, Nn - n)))

    grid = (Np // tm, Nn // tn)

    # VMEM budget: 3 streams (p, q, out) double-buffered + resident `a` row.
    tile_bytes = tm * tn * itemsize
    needed = 6 * tile_bytes + 2 * tn * 4
    vmem_limit = min(max(int(needed * 1.5), 32 * 1024 * 1024), 56 * 1024 * 1024)

    p_new = pl.pallas_call(
        _activation_up_kernel,
        out_shape=jax.ShapeDtypeStruct((Np, Nn), p.dtype),
        grid_spec=pltpu.PrefetchScalarGridSpec(
            num_scalar_prefetch=0,
            grid=grid,
            in_specs=[
                pl.BlockSpec((1, tn), lambda i, j: (0, j)),    # a: tiny bcast row
                pl.BlockSpec((tm, tn), lambda i, j: (i, j)),   # p tile
                pl.BlockSpec((tm, tn), lambda i, j: (i, j)),   # q tile
            ],
            out_specs=pl.BlockSpec((tm, tn), lambda i, j: (i, j)),
        ),
        # p (input index 1) and p_new (output 0): same shape/dtype -> alias the
        # HBM buffer (real, because the jit wrapper donates p).
        input_output_aliases={1: 0},
        compiler_params=pltpu.CompilerParams(
            dimension_semantics=("parallel", "parallel"),
            vmem_limit_bytes=vmem_limit,
        ),
    )(a2d, p, q)

    if Np != N or Nn != n:
        p_new = p_new[:N, :n]
    return p_new


# Donate p so input_output_aliases doesn't trigger a defensive copy.
_activation_up_jit = jax.jit(
    _activation_up_pallas,
    donate_argnums=(0,),
    static_argnames=("block_rows", "block_cols"),
)


def activation_up(p, q, a, *, block_rows=512, block_cols=1024):
    """ActivationUpModule.forward: returns (p + a*tanh(q), q).

    NOTE: p is donated/overwritten; callers must not read p after this call.
    q is returned untouched (never copied or written back by the kernel).
    """
    p_new = _activation_up_jit(p, q, a, block_rows=block_rows, block_cols=block_cols)
    return p_new, q


def _reference_forward(p, q, a):
    """Pure-JAX reference mirroring the PyTorch module."""
    return p + a * jnp.tanh(q), q


if __name__ == "__main__":
    key = jax.random.PRNGKey(0)
    k_p, k_q, k_a = jax.random.split(key, 3)

    N, n = 16, 128   # rows x feature dim (lane-dense feature axis)

    p = jax.random.normal(k_p, (N, n), dtype=jnp.float32)
    q = jax.random.normal(k_q, (N, n), dtype=jnp.float32)
    # Module initializes a = ones((1, n)); perturb so the broadcast-multiply
    # is actually exercised (as it would be after training).
    a = jnp.ones((1, n), dtype=jnp.float32) \
        + 0.1 * jax.random.normal(k_a, (1, n), dtype=jnp.float32)

    # Compute the reference BEFORE the donating kernel call consumes p.
    p_expect, q_expect = _reference_forward(p, q, a)
    jax.block_until_ready(p_expect)

    p_out, q_out = activation_up(p, q, a)
    jax.block_until_ready(p_out)

    assert jnp.allclose(p_out, p_expect, rtol=1e-5, atol=1e-5)
    assert jnp.allclose(q_out, q_expect)

    print("KERNEL_OK")
</pallas_src>

<mosaic_0001>
module attributes {stable_mosaic.version = 11 : i64} {
  func.func @_activation_up_kernel(%arg0: i32, %arg1: i32, %arg2: memref<1x128xf32, #tpu.memory_space<vmem>>, %arg3: memref<16x128xf32, #tpu.memory_space<vmem>>, %arg4: memref<16x128xf32, #tpu.memory_space<vmem>>, %arg5: memref<16x128xf32, #tpu.memory_space<vmem>>) attributes {dimension_semantics = [#tpu.dimension_semantics<parallel>, #tpu.dimension_semantics<parallel>], iteration_bounds = array<i64: 1, 1>, scalar_prefetch = 0 : i64, scratch_operands = 0 : i64, tpu.core_type = #tpu.core_type<tc>, window_params = [{transform_indices = @transform_0, window_bounds = array<i64: 1, 128>}, {transform_indices = @transform_1, window_bounds = array<i64: 16, 128>}, {transform_indices = @transform_2, window_bounds = array<i64: 16, 128>}, {transform_indices = @transform_3, window_bounds = array<i64: 16, 128>}]} {
    %c0 = arith.constant 0 : index
    %c0_0 = arith.constant 0 : index
    %0 = vector.load %arg3[%c0, %c0_0] : memref<16x128xf32, #tpu.memory_space<vmem>>, vector<16x128xf32>
    %c0_1 = arith.constant 0 : index
    %c0_2 = arith.constant 0 : index
    %1 = vector.load %arg4[%c0_1, %c0_2] : memref<16x128xf32, #tpu.memory_space<vmem>>, vector<16x128xf32>
    %c0_3 = arith.constant 0 : index
    %c0_4 = arith.constant 0 : index
    %2 = vector.load %arg2[%c0_3, %c0_4] : memref<1x128xf32, #tpu.memory_space<vmem>>, vector<1x128xf32>
    %3 = math.tanh %1 : vector<16x128xf32>
    %4 = vector.broadcast %2 : vector<1x128xf32> to vector<16x128xf32>
    %5 = arith.mulf %4, %3 : vector<16x128xf32>
    %6 = arith.addf %0, %5 : vector<16x128xf32>
    %c0_5 = arith.constant 0 : index
    %c0_6 = arith.constant 0 : index
    %7 = vector.load %arg5[%c0_5, %c0_6] : memref<16x128xf32, #tpu.memory_space<vmem>>, vector<16x128xf32>
    tpu.vector_store %arg5[%c0_5, %c0_6], %6 {strides = array<i32>} : memref<16x128xf32, #tpu.memory_space<vmem>>, vector<16x128xf32>,
    return
  }
  func.func @transform_0(%arg0: i32, %arg1: i32) -> (i32, i32) {
    %c0_i32 = arith.constant 0 : i32
    %c0_i32_0 = arith.constant 0 : i32
    return %c0_i32, %arg1 : i32, i32
  }
  func.func @transform_1(%arg0: i32, %arg1: i32) -> (i32, i32) {
    %c0_i32 = arith.constant 0 : i32
    return %arg0, %arg1 : i32, i32
  }
  func.func @transform_2(%arg0: i32, %arg1: i32) -> (i32, i32) {
    %c0_i32 = arith.constant 0 : i32
    return %arg0, %arg1 : i32, i32
  }
  func.func @transform_3(%arg0: i32, %arg1: i32) -> (i32, i32) {
    %c0_i32 = arith.constant 0 : i32
    return %arg0, %arg1 : i32, i32
  }
}

</mosaic_0001>

<llo_original>
// kernel: _activation_up_pallas.1
$region0: #{_activation_up_pallas.1}
  #allocation0 [shape = 'u32[]', space=smem, size = 0x4, offset = 0x4, fixed_abs, tag = 'smem constant byte address 0x4 - core index']
  #allocation1 [shape = 'u32[144,128]{1,0:T(1,128)}', space=vmem, size = 0x12000, scoped, tag = 'internal scratch']
  %s0 = inlined_call_operand.vmem [shape: f32[1,128], index: 0, kind: input, shape index: {}]
  %s1 = inlined_call_operand.hbm [shape: f32[16,128], index: 1, kind: input, shape index: {}, may-alias: {1,3}]
  %s2 = inlined_call_operand.hbm [shape: f32[16,128], index: 2, kind: input, shape index: {}]
  %s3 = inlined_call_operand.hbm [shape: f32[16,128], index: 3, kind: output, shape index: {}, may-alias: {1,3}]
  %s4 = sld [smem:[#allocation0]]
  $region30: #{_activation_up_pallas.1} parent=0
    _
  %s6 = ssub.s32 1, %s4
  %s7 = scalar_select 0, %s6, %s4
  $region1: #{_activation_up_pallas.1} parent=0
    #allocation2 [shape = 'u8[8192]{0}', space=vmem, size = 0x2000, scoped, tag = 'input window, operand 1, single buffered']
    #allocation3 [shape = 's32[1]{0}', space=sflag, size = 0x4, scoped, tag = 'scoped memory for _activation_up_pallas.1']
    #allocation4 [shape = 's32[1]{0}', space=sflag, size = 0x4, scoped, tag = 'scoped memory for _activation_up_pallas.1']
    #allocation5 [shape = 'u8[8192]{0}', space=vmem, size = 0x2000, scoped, tag = 'input window, operand 2, single buffered']
    #allocation6 [shape = 's32[1]{0}', space=sflag, size = 0x4, scoped, tag = 'scoped memory for _activation_up_pallas.1']
    #allocation7 [shape = 'u8[8192]{0}', space=vmem, size = 0x2000, scoped, tag = 'output window, operand 0, single buffered']
    %8 = vsyncpa [#allocation3], 0
    %9 = vsyncpa [#allocation6], 0
    %10 = vsyncpa [#allocation4], 0
    // Predicated region
    $region2: #{_activation_up_pallas.1} parent=1 // pred_check
      _
    $region3: #{_activation_up_pallas.1} parent=1 // pred_check_branch
      %12 = sbr.rel (0) target = $region5
    $region4: #{_activation_up_pallas.1} parent=1 // pred_region
      _
    $region5: #{_activation_up_pallas.1} parent=1 // pred_fallthru
      _
    // Predicated region
    $region6: #{_activation_up_pallas.1} parent=1 // pred_check
      _
    $region7: #{_activation_up_pallas.1} parent=1 // pred_check_branch
      %14 = sbr.rel (0) target = $region9
    $region8: #{_activation_up_pallas.1} parent=1 // pred_region
      %s16 = ssub.s32 256, 256
      %17 = vsyncadd [#allocation3], %s16
      %s18 = sshll.u32 [#allocation2], 4
      %s19 = int_to_ptr.vmem [resolvable:$true] %s18
      %24 = dma.hbm_to_vmem [thread:$0]  %s1, 256, %s19, [#allocation3], 128, 128, 8
    $region9: #{_activation_up_pallas.1} parent=1 // pred_fallthru
      _
    // Predicated region
    $region10: #{_activation_up_pallas.1} parent=1 // pred_check
      _
    $region11: #{_activation_up_pallas.1} parent=1 // pred_check_branch
      %26 = sbr.rel (0) target = $region13
    $region12: #{_activation_up_pallas.1} parent=1 // pred_region
      %s28 = ssub.s32 256, 256
      %29 = vsyncadd [#allocation6], %s28
      %s30 = sshll.u32 [#allocation5], 4
      %s31 = int_to_ptr.vmem [resolvable:$true] %s30
      %36 = dma.hbm_to_vmem [thread:$0]  %s2, 256, %s31, [#allocation6], 128, 128, 8
    $region13: #{_activation_up_pallas.1} parent=1 // pred_fallthru
      _
    // Predicated region
    $region14: #{_activation_up_pallas.1} parent=1 // pred_check
      _
    $region15: #{_activation_up_pallas.1} parent=1 // pred_check_branch
      %38 = sbr.rel (0) target = $region17
    $region16: #{_activation_up_pallas.1} parent=1 // pred_region
      %39 = dma.done [#allocation3], 256
    $region17: #{_activation_up_pallas.1} parent=1 // pred_fallthru
      _
    // Predicated region
    $region18: #{_activation_up_pallas.1} parent=1 // pred_check
      _
    $region19: #{_activation_up_pallas.1} parent=1 // pred_check_branch
      %41 = sbr.rel (0) target = $region21
    $region20: #{_activation_up_pallas.1} parent=1 // pred_region
      %42 = dma.done [#allocation6], 256
    $region21: #{_activation_up_pallas.1} parent=1 // pred_fallthru
      _
    %v43 = vld [vmem:[#allocation2] sm:$0xff]
    %v44 = vld [vmem:[#allocation2 + $0x8] sm:$0xff]
    %v45 = vld [vmem:[#allocation5] sm:$0xff]
    %v46 = vld [vmem:[#allocation5 + $0x8] sm:$0xff]
    %v47 = vld [vmem:[%s0] sm:$0x1]
    %v48 = vtanh.pop %v45
    %v49 = vtanh.pop %v46
    %v51 = vlaneseq
    %v52 = vshrl.u32 %v51, 7
    %v53 = vsub.s32 0, %v52
    %v54 = vrot.slane %v47, %v53
    %v56 = vmul.f32 %v54, %v48
    %v57 = vmul.f32 %v54, %v49
    %v58 = vadd.f32 %v43, %v56
    %v59 = vadd.f32 %v44, %v57
    %60 = vst [vmem:[#allocation7] sm:$0xff] %v58
    %61 = vst [vmem:[#allocation7 + $0x8] sm:$0xff] %v59
    // Predicated region
    $region22: #{_activation_up_pallas.1} parent=1 // pred_check
      _
    $region23: #{_activation_up_pallas.1} parent=1 // pred_check_branch
      %63 = sbr.rel (0) target = $region25
    $region24: #{_activation_up_pallas.1} parent=1 // pred_region
      %s65 = ssub.s32 256, 256
      %66 = vsyncadd [#allocation4], %s65
      %s67 = sshll.u32 [#allocation7], 4
      %s68 = int_to_ptr.vmem [resolvable:$true] %s67
      %73 = dma.vmem_to_hbm [thread:$0]  %s68, 256, %s3, [#allocation4], 128, 128, 8
    $region25: #{_activation_up_pallas.1} parent=1 // pred_fallthru
      _
    // Predicated region
    $region26: #{_activation_up_pallas.1} parent=1 // pred_check
      _
    $region27: #{_activation_up_pallas.1} parent=1 // pred_check_branch
      %75 = sbr.rel (0) target = $region29
    $region28: #{_activation_up_pallas.1} parent=1 // pred_region
      %76 = dma.done [#allocation4], 256
    $region29: #{_activation_up_pallas.1} parent=1 // pred_fallthru
      _
    %77 = vsyncpa [#allocation3], 1
    %78 = vsyncpa [#allocation6], 1
    %79 = vsyncpa [#allocation4], 1

</llo_original>
